<compile_context>
chip_gen: v6e
topology: v6e:2x2x1
jax: 0.10.0
libtpu: 0.0.40
codegen_flags: <defaults>
</compile_context>

<pallas_src>
import functools

import jax
import jax.numpy as jnp
from jax.experimental import pallas as pl
from jax.experimental.pallas import tpu as pltpu


def _round_up(x, m):
    return ((x + m - 1) // m) * m


# ---------------------------------------------------------------------------
# Fused MLP kernel: x @ W1 -> ReLU -> ... -> @ WL  (bf16 MXU operands, f32 acc)
# ---------------------------------------------------------------------------
def _fc_mlp_kernel(x_ref, *refs):
    w_refs, o_ref = refs[:-1], refs[-1]
    h = x_ref[...]                                   # already bf16
    for li, w_ref in enumerate(w_refs):
        acc = jnp.dot(h, w_ref[...], preferred_element_type=jnp.float32)
        if li < len(w_refs) - 1:
            h = jnp.maximum(acc, 0.0).astype(jnp.bfloat16)   # fused ReLU
        else:
            o_ref[...] = acc.astype(o_ref.dtype)             # last layer: no ReLU


def _choose_tiling(n):
    """Return (m_pad, tm).

    Small batches: one big tile (grid is a serial loop on v5e/v6e, so splitting
    only adds per-step overhead).  Large batches: 128-aligned 256/512-row tiles
    so v7x gets >=2 steps per TensorCore and the x DMA pipelines.
    """
    if n <= 512:
        m_pad = _round_up(max(n, 16), 16)   # multiple of 16 for bf16 sublane packing
        return m_pad, m_pad                 # single grid step
    tm = 256 if n <= 2048 else 512
    return _round_up(n, tm), tm


def fc_forward(x, weights, arch):
    """Forward of FC: x.view(N, arch[0], 1, 1) -> conv1x1/ReLU chain -> squeeze.

    weights: list of pre-transposed bf16 (Din, Dout_pad) matrices (init_params).
    arch: logical layer widths, e.g. [784, 256, 256, 10].
    """
    n = x.shape[0]
    d_in, d_out = arch[0], arch[-1]
    x2 = x.reshape(n, -1)
    assert x2.shape[1] == d_in, (x2.shape, d_in)

    # Cast once in the wrapper (halves input DMA bytes); pad rows only.
    x2 = x2.astype(jnp.bfloat16)
    m_pad, tm = _choose_tiling(n)
    if m_pad != n:
        x2 = jnp.pad(x2, ((0, m_pad - n), (0, 0)))

    d_out_pad = weights[-1].shape[1]

    in_specs = [pl.BlockSpec((tm, d_in), lambda i: (i, 0))]
    for w in weights:
        kin, kout = w.shape
        # Constant block index => weights stay resident across grid steps.
        in_specs.append(pl.BlockSpec((kin, kout), lambda i: (0, 0)))

    out_pad = pl.pallas_call(
        _fc_mlp_kernel,
        out_shape=jax.ShapeDtypeStruct((m_pad, d_out_pad), jnp.float32),
        grid_spec=pltpu.PrefetchScalarGridSpec(
            num_scalar_prefetch=0,
            grid=(m_pad // tm,),
            in_specs=in_specs,
            out_specs=pl.BlockSpec((tm, d_out_pad), lambda i: (i, 0)),
        ),
        compiler_params=pltpu.CompilerParams(
            dimension_semantics=("parallel",),
        ),
    )(x2, *weights)

    out = out_pad[:n, :d_out]
    # Matches PyTorch out.squeeze() on (N, d_out, 1, 1) -> (N, d_out).
    return jnp.squeeze(out)


# ---------------------------------------------------------------------------
# Parameter construction: Kaiming-like conv1x1 weights, prepped for the kernel
# ---------------------------------------------------------------------------
def init_params(key, arch):
    """Weights pre-transposed to (Din, Dout), bf16, output dim zero-padded to a
    multiple of 128.  The input dim of layer 0 is left unpadded (matches x);
    deeper layers take the previous layer's padded width (padded rows are zero,
    and padded activations are relu(0)=0, so results are unchanged)."""
    keys = jax.random.split(key, len(arch) - 1)
    weights = []
    din_pad = arch[0]
    for k, din, dout in zip(keys, arch[:-1], arch[1:]):
        w = jax.random.normal(k, (dout, din), jnp.float32) * (2.0 / din) ** 0.5
        dout_pad = _round_up(dout, 128)
        wp = jnp.zeros((din_pad, dout_pad), jnp.bfloat16)
        wp = wp.at[:din, :dout].set(w.T.astype(jnp.bfloat16))
        weights.append(wp)
        din_pad = dout_pad
    return weights


def _reference_forward(x, weights, arch):
    """Pure-JAX reference using the same bf16 weights / bf16 input rounding."""
    n = x.shape[0]
    h = x.reshape(n, -1).astype(jnp.bfloat16).astype(jnp.float32)
    for li, w in enumerate(weights):
        h = h @ w.astype(jnp.float32)
        if li < len(weights) - 1:
            h = jnp.maximum(h, 0.0).astype(jnp.bfloat16).astype(jnp.float32)
    return jnp.squeeze(h[:, : arch[-1]])


if __name__ == "__main__":
    key = jax.random.PRNGKey(0)
    k_w, k_x = jax.random.split(key)

    # Default branch of FC.forward (MNIST-like set): x.view(N, 28*28, 1, 1),
    # with args.fc_architecture = "784_256_256_10" (the 4-layer variant).
    # TODO(synk): edge-popup scoring/masking (builder.conv1x1 subnet mask) is
    # outside this forward spec; plain dense conv1x1 weights are used.
    arch = [28 * 28, 256, 256, 10]
    weights = init_params(k_w, arch)

    x = jax.random.normal(k_x, (2, 1, 28, 28), jnp.float32)

    fwd = jax.jit(functools.partial(fc_forward, arch=arch))
    out = fwd(x, weights)
    jax.block_until_ready(out)

    assert out.shape == (2, 10), out.shape
    assert bool(jnp.all(jnp.isfinite(out)))

    ref = _reference_forward(x, weights, arch)
    assert bool(jnp.allclose(out, ref, rtol=1e-1, atol=1e-1)), (
        float(jnp.max(jnp.abs(out - ref))))

    print("KERNEL_OK")
</pallas_src>

<mosaic_0001>
module attributes {stable_mosaic.version = 11 : i64} {
  func.func @_fc_mlp_kernel(%arg0: i32, %arg1: memref<16x784xbf16, #tpu.memory_space<vmem>>, %arg2: memref<784x256xbf16, #tpu.memory_space<vmem>>, %arg3: memref<256x256xbf16, #tpu.memory_space<vmem>>, %arg4: memref<256x128xbf16, #tpu.memory_space<vmem>>, %arg5: memref<16x128xf32, #tpu.memory_space<vmem>>) attributes {dimension_semantics = [#tpu.dimension_semantics<parallel>], iteration_bounds = array<i64: 1>, scalar_prefetch = 0 : i64, scratch_operands = 0 : i64, tpu.core_type = #tpu.core_type<tc>, window_params = [{transform_indices = @transform_0, window_bounds = array<i64: 16, 784>}, {pipeline_mode = #tpu.pipeline_mode<synchronous>, transform_indices = @transform_1, window_bounds = array<i64: 784, 256>}, {pipeline_mode = #tpu.pipeline_mode<synchronous>, transform_indices = @transform_2, window_bounds = array<i64: 256, 256>}, {pipeline_mode = #tpu.pipeline_mode<synchronous>, transform_indices = @transform_3, window_bounds = array<i64: 256, 128>}, {transform_indices = @transform_4, window_bounds = array<i64: 16, 128>}]} {
    %c0 = arith.constant 0 : index
    %c0_0 = arith.constant 0 : index
    %0 = vector.load %arg1[%c0, %c0_0] : memref<16x784xbf16, #tpu.memory_space<vmem>>, vector<16x784xbf16>
    %c0_1 = arith.constant 0 : index
    %c0_2 = arith.constant 0 : index
    %1 = vector.load %arg2[%c0_1, %c0_2] : memref<784x256xbf16, #tpu.memory_space<vmem>>, vector<784x256xbf16>
    %cst = arith.constant dense<0.000000e+00> : vector<16x256xf32>
    %2 = tpu.matmul %0, %1, %cst {dimension_numbers = #tpu.dot_dimension_numbers<[1], [0], [0], [1], [0, 0, 1, 1], [], []>} : vector<16x784xbf16>, vector<784x256xbf16>, vector<16x256xf32> -> vector<16x256xf32>
    %cst_3 = arith.constant 0.000000e+00 : f32
    %3 = vector.broadcast %cst_3 : f32 to vector<16x256xf32>
    %4 = arith.maximumf %2, %3 : vector<16x256xf32>
    %5 = arith.truncf %4 : vector<16x256xf32> to vector<16x256xbf16>
    %c0_4 = arith.constant 0 : index
    %c0_5 = arith.constant 0 : index
    %6 = vector.load %arg3[%c0_4, %c0_5] : memref<256x256xbf16, #tpu.memory_space<vmem>>, vector<256x256xbf16>
    %cst_6 = arith.constant dense<0.000000e+00> : vector<16x256xf32>
    %7 = tpu.matmul %5, %6, %cst_6 {dimension_numbers = #tpu.dot_dimension_numbers<[1], [0], [0], [1], [0, 0, 1, 1], [], []>} : vector<16x256xbf16>, vector<256x256xbf16>, vector<16x256xf32> -> vector<16x256xf32>
    %cst_7 = arith.constant 0.000000e+00 : f32
    %8 = vector.broadcast %cst_7 : f32 to vector<16x256xf32>
    %9 = arith.maximumf %7, %8 : vector<16x256xf32>
    %10 = arith.truncf %9 : vector<16x256xf32> to vector<16x256xbf16>
    %c0_8 = arith.constant 0 : index
    %c0_9 = arith.constant 0 : index
    %11 = vector.load %arg4[%c0_8, %c0_9] : memref<256x128xbf16, #tpu.memory_space<vmem>>, vector<256x128xbf16>
    %cst_10 = arith.constant dense<0.000000e+00> : vector<16x128xf32>
    %12 = tpu.matmul %10, %11, %cst_10 {dimension_numbers = #tpu.dot_dimension_numbers<[1], [0], [0], [1], [0, 0, 1, 1], [], []>} : vector<16x256xbf16>, vector<256x128xbf16>, vector<16x128xf32> -> vector<16x128xf32>
    %c0_11 = arith.constant 0 : index
    %c0_12 = arith.constant 0 : index
    %13 = vector.load %arg5[%c0_11, %c0_12] : memref<16x128xf32, #tpu.memory_space<vmem>>, vector<16x128xf32>
    tpu.vector_store %arg5[%c0_11, %c0_12], %12 {strides = array<i32>} : memref<16x128xf32, #tpu.memory_space<vmem>>, vector<16x128xf32>,
    return
  }
  func.func @transform_0(%arg0: i32) -> (i32, i32) {
    %c0_i32 = arith.constant 0 : i32
    %c0_i32_0 = arith.constant 0 : i32
    return %arg0, %c0_i32 : i32, i32
  }
  func.func @transform_1(%arg0: i32) -> (i32, i32) {
    %c0_i32 = arith.constant 0 : i32
    %c0_i32_0 = arith.constant 0 : i32
    %c0_i32_1 = arith.constant 0 : i32
    return %c0_i32, %c0_i32_0 : i32, i32
  }
  func.func @transform_2(%arg0: i32) -> (i32, i32) {
    %c0_i32 = arith.constant 0 : i32
    %c0_i32_0 = arith.constant 0 : i32
    %c0_i32_1 = arith.constant 0 : i32
    return %c0_i32, %c0_i32_0 : i32, i32
  }
  func.func @transform_3(%arg0: i32) -> (i32, i32) {
    %c0_i32 = arith.constant 0 : i32
    %c0_i32_0 = arith.constant 0 : i32
    %c0_i32_1 = arith.constant 0 : i32
    return %c0_i32, %c0_i32_0 : i32, i32
  }
  func.func @transform_4(%arg0: i32) -> (i32, i32) {
    %c0_i32 = arith.constant 0 : i32
    %c0_i32_0 = arith.constant 0 : i32
    return %arg0, %c0_i32 : i32, i32
  }
}

</mosaic_0001>

<llo_original>
// kernel: fc_forward.1
$region0: #{fc_forward.1}
  #allocation0 [shape = 'u32[]', space=smem, size = 0x4, offset = 0x4, fixed_abs, tag = 'smem constant byte address 0x4 - core index']
  #allocation1 [shape = 'u32[144,128]{1,0:T(1,128)}', space=vmem, size = 0x12000, scoped, tag = 'internal scratch']
  %s0 = inlined_call_operand.vmem [shape: bf16[16,784], index: 0, kind: input, shape index: {}]
  %s1 = inlined_call_operand.hbm [shape: bf16[784,256], index: 1, kind: input, shape index: {}]
  %s2 = inlined_call_operand.hbm [shape: bf16[256,256], index: 2, kind: input, shape index: {}]
  %s3 = inlined_call_operand.vmem [shape: bf16[256,128], index: 3, kind: input, shape index: {}]
  %s4 = inlined_call_operand.vmem [shape: f32[16,128], index: 4, kind: output, shape index: {}]
  %s5 = sld [smem:[#allocation0]]
  $region34: #{fc_forward.1} parent=0
    _
  %s7 = ssub.s32 1, %s5
  %s8 = scalar_select 0, %s7, %s5
  $region1: #{fc_forward.1} parent=0
    #allocation2 [shape = 'u8[401408]{0}', space=vmem, size = 0x62000, scoped, tag = 'input window, operand 1, single buffered']
    #allocation3 [shape = 's32[1]{0}', space=sflag, size = 0x4, scoped, tag = 'scoped memory for fc_forward.1']
    #allocation4 [shape = 'u8[131072]{0}', space=vmem, size = 0x20000, scoped, tag = 'input window, operand 2, single buffered']
    #allocation5 [shape = 's32[1]{0}', space=sflag, size = 0x4, scoped, tag = 'scoped memory for fc_forward.1']
    %9 = vsyncpa [#allocation3], 0
    %10 = vsyncpa [#allocation5], 0
    // Predicated region
    $region2: #{fc_forward.1} parent=1 // pred_check
      _
    $region3: #{fc_forward.1} parent=1 // pred_check_branch
      %12 = sbr.rel (0) target = $region5
    $region4: #{fc_forward.1} parent=1 // pred_region
      _
    $region5: #{fc_forward.1} parent=1 // pred_fallthru
      _
    // Predicated region
    $region6: #{fc_forward.1} parent=1 // pred_check
      _
    $region7: #{fc_forward.1} parent=1 // pred_check_branch
      %14 = sbr.rel (0) target = $region9
    $region8: #{fc_forward.1} parent=1 // pred_region
      %s16 = ssub.s32 12544, 12544
      %17 = vsyncadd [#allocation3], %s16
      %s18 = sshll.u32 [#allocation2], 4
      %s19 = int_to_ptr.vmem [resolvable:$true] %s18
      %24 = dma.hbm_to_vmem [thread:$0]  %s1, 12544, %s19, [#allocation3], 128, 128, 8
    $region9: #{fc_forward.1} parent=1 // pred_fallthru
      _
    // Predicated region
    $region10: #{fc_forward.1} parent=1 // pred_check
      _
    $region11: #{fc_forward.1} parent=1 // pred_check_branch
      %26 = sbr.rel (0) target = $region13
    $region12: #{fc_forward.1} parent=1 // pred_region
      %s28 = ssub.s32 4096, 4096
      %29 = vsyncadd [#allocation5], %s28
      %s30 = sshll.u32 [#allocation4], 4
      %s31 = int_to_ptr.vmem [resolvable:$true] %s30
      %36 = dma.hbm_to_vmem [thread:$0]  %s2, 4096, %s31, [#allocation5], 128, 128, 8
    $region13: #{fc_forward.1} parent=1 // pred_fallthru
      _
    // Predicated region
    $region14: #{fc_forward.1} parent=1 // pred_check
      _
    $region15: #{fc_forward.1} parent=1 // pred_check_branch
      %38 = sbr.rel (0) target = $region17
    $region16: #{fc_forward.1} parent=1 // pred_region
      _
    $region17: #{fc_forward.1} parent=1 // pred_fallthru
      _
    // Predicated region
    $region18: #{fc_forward.1} parent=1 // pred_check
      _
    $region19: #{fc_forward.1} parent=1 // pred_check_branch
      %40 = sbr.rel (0) target = $region21
    $region20: #{fc_forward.1} parent=1 // pred_region
      %41 = dma.done [#allocation3], 12544
    $region21: #{fc_forward.1} parent=1 // pred_fallthru
      _
    // Predicated region
    $region22: #{fc_forward.1} parent=1 // pred_check
      _
    $region23: #{fc_forward.1} parent=1 // pred_check_branch
      %43 = sbr.rel (0) target = $region25
    $region24: #{fc_forward.1} parent=1 // pred_region
      %44 = dma.done [#allocation5], 4096
    $region25: #{fc_forward.1} parent=1 // pred_fallthru
      _
    %v46 = vld [vmem:[%s0] sm:$0xff]
    %v47 = vld [vmem:[%s0 + $0x8] sm:$0xff]
    %v48 = vld [vmem:[%s0 + $0x10] sm:$0xff]
    %v49 = vld [vmem:[%s0 + $0x18] sm:$0xf]
    %v50 = vld [vmem:[%s0 + $0x1c] sm:$0xff]
    %v51 = vld [vmem:[%s0 + $0x24] sm:$0xff]
    %v52 = vld [vmem:[%s0 + $0x2c] sm:$0xff]
    %v53 = vld [vmem:[%s0 + $0x34] sm:$0xf]
    %v54 = vld [vmem:[#allocation2] sm:$0xff]
    %v55 = vld [vmem:[#allocation2 + $0x8] sm:$0xff]
    %v56 = vld [vmem:[#allocation2 + $0x10] sm:$0xff]
    %v57 = vld [vmem:[#allocation2 + $0x18] sm:$0xff]
    %v58 = vld [vmem:[#allocation2 + $0x20] sm:$0xff]
    %v59 = vld [vmem:[#allocation2 + $0x28] sm:$0xff]
    %v60 = vld [vmem:[#allocation2 + $0x30] sm:$0xff]
    %v61 = vld [vmem:[#allocation2 + $0x38] sm:$0xff]
    %v62 = vld [vmem:[#allocation2 + $0x40] sm:$0xff]
    %v63 = vld [vmem:[#allocation2 + $0x48] sm:$0xff]
    %v64 = vld [vmem:[#allocation2 + $0x50] sm:$0xff]
    %v65 = vld [vmem:[#allocation2 + $0x58] sm:$0xff]
    %v66 = vld [vmem:[#allocation2 + $0x60] sm:$0xff]
    %v67 = vld [vmem:[#allocation2 + $0x68] sm:$0xff]
    %v68 = vld [vmem:[#allocation2 + $0x70] sm:$0xff]
    %v69 = vld [vmem:[#allocation2 + $0x78] sm:$0xff]
    %v70 = vld [vmem:[#allocation2 + $0x80] sm:$0xff]
    %v71 = vld [vmem:[#allocation2 + $0x88] sm:$0xff]
    %v72 = vld [vmem:[#allocation2 + $0x90] sm:$0xff]
    %v73 = vld [vmem:[#allocation2 + $0x98] sm:$0xff]
    %v74 = vld [vmem:[#allocation2 + $0xa0] sm:$0xff]
    %v75 = vld [vmem:[#allocation2 + $0xa8] sm:$0xff]
    %v76 = vld [vmem:[#allocation2 + $0xb0] sm:$0xff]
    %v77 = vld [vmem:[#allocation2 + $0xb8] sm:$0xff]
    %v78 = vld [vmem:[#allocation2 + $0xc0] sm:$0xff]
    %v79 = vld [vmem:[#allocation2 + $0xc8] sm:$0xff]
    %v80 = vld [vmem:[#allocation2 + $0xd0] sm:$0xff]
    %v81 = vld [vmem:[#allocation2 + $0xd8] sm:$0xff]
    %v82 = vld [vmem:[#allocation2 + $0xe0] sm:$0xff]
    %v83 = vld [vmem:[#allocation2 + $0xe8] sm:$0xff]
    %v84 = vld [vmem:[#allocation2 + $0xf0] sm:$0xff]
    %v85 = vld [vmem:[#allocation2 + $0xf8] sm:$0xff]
    %v86 = vld [vmem:[#allocation2 + $0x100] sm:$0xff]
    %v87 = vld [vmem:[#allocation2 + $0x108] sm:$0xff]
    %v88 = vld [vmem:[#allocation2 + $0x110] sm:$0xff]
    %v89 = vld [vmem:[#allocation2 + $0x118] sm:$0xff]
    %v90 = vld [vmem:[#allocation2 + $0x120] sm:$0xff]
    %v91 = vld [vmem:[#allocation2 + $0x128] sm:$0xff]
    %v92 = vld [vmem:[#allocation2 + $0x130] sm:$0xff]
    %v93 = vld [vmem:[#allocation2 + $0x138] sm:$0xff]
    %v94 = vld [vmem:[#allocation2 + $0x140] sm:$0xff]
    %v95 = vld [vmem:[#allocation2 + $0x148] sm:$0xff]
    %v96 = vld [vmem:[#allocation2 + $0x150] sm:$0xff]
    %v97 = vld [vmem:[#allocation2 + $0x158] sm:$0xff]
    %v98 = vld [vmem:[#allocation2 + $0x160] sm:$0xff]
    %v99 = vld [vmem:[#allocation2 + $0x168] sm:$0xff]
    %v100 = vld [vmem:[#allocation2 + $0x170] sm:$0xff]
    %v101 = vld [vmem:[#allocation2 + $0x178] sm:$0xff]
    %v102 = vld [vmem:[#allocation2 + $0x180] sm:$0xff]
    %v103 = vld [vmem:[#allocation2 + $0x188] sm:$0xff]
    %v104 = vld [vmem:[#allocation2 + $0x190] sm:$0xff]
    %v105 = vld [vmem:[#allocation2 + $0x198] sm:$0xff]
    %v106 = vld [vmem:[#allocation2 + $0x1a0] sm:$0xff]
    %v107 = vld [vmem:[#allocation2 + $0x1a8] sm:$0xff]
    %v108 = vld [vmem:[#allocation2 + $0x1b0] sm:$0xff]
    %v109 = vld [vmem:[#allocation2 + $0x1b8] sm:$0xff]
    %v110 = vld [vmem:[#allocation2 + $0x1c0] sm:$0xff]
    %v111 = vld [vmem:[#allocation2 + $0x1c8] sm:$0xff]
    %v112 = vld [vmem:[#allocation2 + $0x1d0] sm:$0xff]
    %v113 = vld [vmem:[#allocation2 + $0x1d8] sm:$0xff]
    %v114 = vld [vmem:[#allocation2 + $0x1e0] sm:$0xff]
    %v115 = vld [vmem:[#allocation2 + $0x1e8] sm:$0xff]
    %v116 = vld [vmem:[#allocation2 + $0x1f0] sm:$0xff]
    %v117 = vld [vmem:[#allocation2 + $0x1f8] sm:$0xff]
    %v118 = vld [vmem:[#allocation2 + $0x200] sm:$0xff]
    %v119 = vld [vmem:[#allocation2 + $0x208] sm:$0xff]
    %v120 = vld [vmem:[#allocation2 + $0x210] sm:$0xff]
    %v121 = vld [vmem:[#allocation2 + $0x218] sm:$0xff]
    %v122 = vld [vmem:[#allocation2 + $0x220] sm:$0xff]
    %v123 = vld [vmem:[#allocation2 + $0x228] sm:$0xff]
    %v124 = vld [vmem:[#allocation2 + $0x230] sm:$0xff]
    %v125 = vld [vmem:[#allocation2 + $0x238] sm:$0xff]
    %v126 = vld [vmem:[#allocation2 + $0x240] sm:$0xff]
    %v127 = vld [vmem:[#allocation2 + $0x248] sm:$0xff]
    %v128 = vld [vmem:[#allocation2 + $0x250] sm:$0xff]
    %v129 = vld [vmem:[#allocation2 + $0x258] sm:$0xff]
    %v130 = vld [vmem:[#allocation2 + $0x260] sm:$0xff]
    %v131 = vld [vmem:[#allocation2 + $0x268] sm:$0xff]
    %v132 = vld [vmem:[#allocation2 + $0x270] sm:$0xff]
    %v133 = vld [vmem:[#allocation2 + $0x278] sm:$0xff]
    %v134 = vld [vmem:[#allocation2 + $0x280] sm:$0xff]
    %v135 = vld [vmem:[#allocation2 + $0x288] sm:$0xff]
    %v136 = vld [vmem:[#allocation2 + $0x290] sm:$0xff]
    %v137 = vld [vmem:[#allocation2 + $0x298] sm:$0xff]
    %v138 = vld [vmem:[#allocation2 + $0x2a0] sm:$0xff]
    %v139 = vld [vmem:[#allocation2 + $0x2a8] sm:$0xff]
    %v140 = vld [vmem:[#allocation2 + $0x2b0] sm:$0xff]
    %v141 = vld [vmem:[#allocation2 + $0x2b8] sm:$0xff]
    %v142 = vld [vmem:[#allocation2 + $0x2c0] sm:$0xff]
    %v143 = vld [vmem:[#allocation2 + $0x2c8] sm:$0xff]
    %v144 = vld [vmem:[#allocation2 + $0x2d0] sm:$0xff]
    %v145 = vld [vmem:[#allocation2 + $0x2d8] sm:$0xff]
    %v146 = vld [vmem:[#allocation2 + $0x2e0] sm:$0xff]
    %v147 = vld [vmem:[#allocation2 + $0x2e8] sm:$0xff]
    %v148 = vld [vmem:[#allocation2 + $0x2f0] sm:$0xff]
    %v149 = vld [vmem:[#allocation2 + $0x2f8] sm:$0xff]
    %v150 = vld [vmem:[#allocation2 + $0x300] sm:$0xff]
    %v151 = vld [vmem:[#allocation2 + $0x308] sm:$0xff]
    %v160 = vunpack.c.l.b16 %v46
    %v161 = vunpack.c.h.b16 %v46
    %v162 = vunpack.c.l.b16 %v47
    %v163 = vunpack.c.h.b16 %v47
    %v164 = vunpack.c.l.b16 %v48
    %v165 = vunpack.c.h.b16 %v48
    %v166 = vunpack.c.l.b16 %v49
    %v167 = vunpack.c.l.b16 %v50
    %v168 = vunpack.c.h.b16 %v50
    %v169 = vunpack.c.l.b16 %v51
    %v170 = vunpack.c.h.b16 %v51
    %v171 = vunpack.c.l.b16 %v52
    %v172 = vunpack.c.h.b16 %v52
    %v173 = vunpack.c.l.b16 %v53
    %v174 = vpack.c.b16 %v167, %v160
    %v175 = vpack.c.b16 %v168, %v161
    %v176 = vpack.c.b16 %v169, %v162
    %v177 = vpack.c.b16 %v170, %v163
    %v178 = vpack.c.b16 %v171, %v164
    %v179 = vpack.c.b16 %v172, %v165
    %v180 = vpack.c.b16 %v173, %v166
    %v285 = vunpack.c.l.b16 %v54
    %v286 = vunpack.c.h.b16 %v54
    %v287 = vunpack.c.l.b16 %v55
    %v288 = vunpack.c.h.b16 %v55
    %v289 = vunpack.c.l.b16 %v56
    %v290 = vunpack.c.h.b16 %v56
    %v291 = vunpack.c.l.b16 %v57
    %v292 = vunpack.c.h.b16 %v57
    %v293 = vunpack.c.l.b16 %v58
    %v294 = vunpack.c.h.b16 %v58
    %v295 = vunpack.c.l.b16 %v59
    %v296 = vunpack.c.h.b16 %v59
    %v297 = vunpack.c.l.b16 %v60
    %v298 = vunpack.c.h.b16 %v60
    %v299 = vunpack.c.l.b16 %v61
    %v300 = vunpack.c.h.b16 %v61
    %v301 = vunpack.c.l.b16 %v62
    %v302 = vunpack.c.h.b16 %v62
    %v303 = vunpack.c.l.b16 %v63
    %v304 = vunpack.c.h.b16 %v63
    %v305 = vunpack.c.l.b16 %v64
    %v306 = vunpack.c.h.b16 %v64
    %v307 = vunpack.c.l.b16 %v65
    %v308 = vunpack.c.h.b16 %v65
    %v309 = vunpack.c.l.b16 %v66
    %v310 = vunpack.c.h.b16 %v66
    %v311 = vunpack.c.l.b16 %v67
    %v312 = vunpack.c.h.b16 %v67
    %v313 = vunpack.c.l.b16 %v68
    %v314 = vunpack.c.h.b16 %v68
    %v315 = vunpack.c.l.b16 %v69
    %v316 = vunpack.c.h.b16 %v69
    %v317 = vunpack.c.l.b16 %v70
    %v318 = vunpack.c.h.b16 %v70
    %v319 = vunpack.c.l.b16 %v71
    %v320 = vunpack.c.h.b16 %v71
    %v321 = vunpack.c.l.b16 %v72
    %v322 = vunpack.c.h.b16 %v72
    %v323 = vunpack.c.l.b16 %v73
    %v324 = vunpack.c.h.b16 %v73
    %v325 = vunpack.c.l.b16 %v74
    %v326 = vunpack.c.h.b16 %v74
    %v327 = vunpack.c.l.b16 %v75
    %v328 = vunpack.c.h.b16 %v75
    %v329 = vunpack.c.l.b16 %v76
    %v330 = vunpack.c.h.b16 %v76
    %v331 = vunpack.c.l.b16 %v77
    %v332 = vunpack.c.h.b16 %v77
    %v333 = vunpack.c.l.b16 %v78
    %v334 = vunpack.c.h.b16 %v78
    %v335 = vunpack.c.l.b16 %v79
    %v336 = vunpack.c.h.b16 %v79
    %v337 = vunpack.c.l.b16 %v80
    %v338 = vunpack.c.h.b16 %v80
    %v339 = vunpack.c.l.b16 %v81
    %v340 = vunpack.c.h.b16 %v81
    %v341 = vunpack.c.l.b16 %v82
    %v342 = vunpack.c.h.b16 %v82
    %v343 = vunpack.c.l.b16 %v83
    %v344 = vunpack.c.h.b16 %v83
    %v345 = vunpack.c.l.b16 %v84
    %v346 = vunpack.c.h.b16 %v84
    %v347 = vunpack.c.l.b16 %v85
    %v348 = vunpack.c.h.b16 %v85
    %v349 = vunpack.c.l.b16 %v86
    %v350 = vunpack.c.h.b16 %v86
    %v351 = vunpack.c.l.b16 %v87
    %v352 = vunpack.c.h.b16 %v87
    %v353 = vunpack.c.l.b16 %v88
    %v354 = vunpack.c.h.b16 %v88
    %v355 = vunpack.c.l.b16 %v89
    %v356 = vunpack.c.h.b16 %v89
    %v357 = vunpack.c.l.b16 %v90
    %v358 = vunpack.c.h.b16 %v90
    %v359 = vunpack.c.l.b16 %v91
    %v360 = vunpack.c.h.b16 %v91
    %v361 = vunpack.c.l.b16 %v92
    %v362 = vunpack.c.h.b16 %v92
    %v363 = vunpack.c.l.b16 %v93
    %v364 = vunpack.c.h.b16 %v93
    %v365 = vunpack.c.l.b16 %v94
    %v366 = vunpack.c.h.b16 %v94
    %v367 = vunpack.c.l.b16 %v95
    %v368 = vunpack.c.h.b16 %v95
    %v369 = vunpack.c.l.b16 %v96
    %v370 = vunpack.c.h.b16 %v96
    %v371 = vunpack.c.l.b16 %v97
    %v372 = vunpack.c.h.b16 %v97
    %v373 = vunpack.c.l.b16 %v98
    %v374 = vunpack.c.h.b16 %v98
    %v375 = vunpack.c.l.b16 %v99
    %v376 = vunpack.c.h.b16 %v99
    %v377 = vunpack.c.l.b16 %v100
    %v378 = vunpack.c.h.b16 %v100
    %v379 = vunpack.c.l.b16 %v101
    %v380 = vunpack.c.h.b16 %v101
    %v381 = vunpack.c.l.b16 %v102
    %v382 = vunpack.c.h.b16 %v102
    %v383 = vunpack.c.l.b16 %v103
    %v384 = vunpack.c.h.b16 %v103
    %v385 = vunpack.c.l.b16 %v104
    %v386 = vunpack.c.h.b16 %v104
    %v387 = vunpack.c.l.b16 %v105
    %v388 = vunpack.c.h.b16 %v105
    %v389 = vunpack.c.l.b16 %v106
    %v390 = vunpack.c.h.b16 %v106
    %v391 = vunpack.c.l.b16 %v107
    %v392 = vunpack.c.h.b16 %v107
    %v393 = vunpack.c.l.b16 %v108
    %v394 = vunpack.c.h.b16 %v108
    %v395 = vunpack.c.l.b16 %v109
    %v396 = vunpack.c.h.b16 %v109
    %v397 = vunpack.c.l.b16 %v110
    %v398 = vunpack.c.h.b16 %v110
    %v399 = vunpack.c.l.b16 %v111
    %v400 = vunpack.c.h.b16 %v111
    %v401 = vunpack.c.l.b16 %v112
    %v402 = vunpack.c.h.b16 %v112
    %v403 = vunpack.c.l.b16 %v113
    %v404 = vunpack.c.h.b16 %v113
    %v405 = vunpack.c.l.b16 %v114
    %v406 = vunpack.c.h.b16 %v114
    %v407 = vunpack.c.l.b16 %v115
    %v408 = vunpack.c.h.b16 %v115
    %v409 = vunpack.c.l.b16 %v116
    %v410 = vunpack.c.h.b16 %v116
    %v411 = vunpack.c.l.b16 %v117
    %v412 = vunpack.c.h.b16 %v117
    %v413 = vunpack.c.l.b16 %v118
    %v414 = vunpack.c.h.b16 %v118
    %v415 = vunpack.c.l.b16 %v119
    %v416 = vunpack.c.h.b16 %v119
    %v417 = vunpack.c.l.b16 %v120
    %v418 = vunpack.c.h.b16 %v120
    %v419 = vunpack.c.l.b16 %v121
    %v420 = vunpack.c.h.b16 %v121
    %v421 = vunpack.c.l.b16 %v122
    %v422 = vunpack.c.h.b16 %v122
    %v423 = vunpack.c.l.b16 %v123
    %v424 = vunpack.c.h.b16 %v123
    %v425 = vunpack.c.l.b16 %v124
    %v426 = vunpack.c.h.b16 %v124
    %v427 = vunpack.c.l.b16 %v125
    %v428 = vunpack.c.h.b16 %v125
    %v429 = vunpack.c.l.b16 %v126
    %v430 = vunpack.c.h.b16 %v126
    %v431 = vunpack.c.l.b16 %v127
    %v432 = vunpack.c.h.b16 %v127
    %v433 = vunpack.c.l.b16 %v128
    %v434 = vunpack.c.h.b16 %v128
    %v435 = vunpack.c.l.b16 %v129
    %v436 = vunpack.c.h.b16 %v129
    %v437 = vunpack.c.l.b16 %v130
    %v438 = vunpack.c.h.b16 %v130
    %v439 = vunpack.c.l.b16 %v131
    %v440 = vunpack.c.h.b16 %v131
    %v441 = vunpack.c.l.b16 %v132
    %v442 = vunpack.c.h.b16 %v132
    %v443 = vunpack.c.l.b16 %v133
    %v444 = vunpack.c.h.b16 %v133
    %v445 = vunpack.c.l.b16 %v134
    %v446 = vunpack.c.h.b16 %v134
    %v447 = vunpack.c.l.b16 %v135
    %v448 = vunpack.c.h.b16 %v135
    %v449 = vunpack.c.l.b16 %v136
    %v450 = vunpack.c.h.b16 %v136
    %v451 = vunpack.c.l.b16 %v137
    %v452 = vunpack.c.h.b16 %v137
    %v453 = vunpack.c.l.b16 %v138
    %v454 = vunpack.c.h.b16 %v138
    %v455 = vunpack.c.l.b16 %v139
    %v456 = vunpack.c.h.b16 %v139
    %v457 = vunpack.c.l.b16 %v140
    %v458 = vunpack.c.h.b16 %v140
    %v459 = vunpack.c.l.b16 %v141
    %v460 = vunpack.c.h.b16 %v141
    %v461 = vunpack.c.l.b16 %v142
    %v462 = vunpack.c.h.b16 %v142
    %v463 = vunpack.c.l.b16 %v143
    %v464 = vunpack.c.h.b16 %v143
    %v465 = vunpack.c.l.b16 %v144
    %v466 = vunpack.c.h.b16 %v144
    %v467 = vunpack.c.l.b16 %v145
    %v468 = vunpack.c.h.b16 %v145
    %v469 = vunpack.c.l.b16 %v146
    %v470 = vunpack.c.h.b16 %v146
    %v471 = vunpack.c.l.b16 %v147
    %v472 = vunpack.c.h.b16 %v147
    %v473 = vunpack.c.l.b16 %v148
    %v474 = vunpack.c.h.b16 %v148
    %v475 = vunpack.c.l.b16 %v149
    %v476 = vunpack.c.h.b16 %v149
    %v477 = vunpack.c.l.b16 %v150
    %v478 = vunpack.c.h.b16 %v150
    %v479 = vunpack.c.l.b16 %v151
    %v480 = vunpack.c.h.b16 %v151
    %v481 = vpack.c.b16 %v287, %v285
    %v482 = vpack.c.b16 %v288, %v286
    %v483 = vpack.c.b16 %v291, %v289
    %v484 = vpack.c.b16 %v292, %v290
    %v485 = vpack.c.b16 %v295, %v293
    %v486 = vpack.c.b16 %v296, %v294
    %v487 = vpack.c.b16 %v299, %v297
    %v488 = vpack.c.b16 %v300, %v298
    %v489 = vpack.c.b16 %v303, %v301
    %v490 = vpack.c.b16 %v304, %v302
    %v491 = vpack.c.b16 %v307, %v305
    %v492 = vpack.c.b16 %v308, %v306
    %v493 = vpack.c.b16 %v311, %v309
    %v494 = vpack.c.b16 %v312, %v310
    %v495 = vpack.c.b16 %v315, %v313
    %v496 = vpack.c.b16 %v316, %v314
    %v497 = vpack.c.b16 %v319, %v317
    %v498 = vpack.c.b16 %v320, %v318
    %v499 = vpack.c.b16 %v323, %v321
    %v500 = vpack.c.b16 %v324, %v322
    %v501 = vpack.c.b16 %v327, %v325
    %v502 = vpack.c.b16 %v328, %v326
    %v503 = vpack.c.b16 %v331, %v329
    %v504 = vpack.c.b16 %v332, %v330
    %v505 = vpack.c.b16 %v335, %v333
    %v506 = vpack.c.b16 %v336, %v334
    %v507 = vpack.c.b16 %v339, %v337
    %v508 = vpack.c.b16 %v340, %v338
    %v509 = vpack.c.b16 %v343, %v341
    %v510 = vpack.c.b16 %v344, %v342
    %v511 = vpack.c.b16 %v347, %v345
    %v512 = vpack.c.b16 %v348, %v346
    %v513 = vpack.c.b16 %v351, %v349
    %v514 = vpack.c.b16 %v352, %v350
    %v515 = vpack.c.b16 %v355, %v353
    %v516 = vpack.c.b16 %v356, %v354
    %v517 = vpack.c.b16 %v359, %v357
    %v518 = vpack.c.b16 %v360, %v358
    %v519 = vpack.c.b16 %v363, %v361
    %v520 = vpack.c.b16 %v364, %v362
    %v521 = vpack.c.b16 %v367, %v365
    %v522 = vpack.c.b16 %v368, %v366
    %v523 = vpack.c.b16 %v371, %v369
    %v524 = vpack.c.b16 %v372, %v370
    %v525 = vpack.c.b16 %v375, %v373
    %v526 = vpack.c.b16 %v376, %v374
    %v527 = vpack.c.b16 %v379, %v377
    %v528 = vpack.c.b16 %v380, %v378
    %v529 = vpack.c.b16 %v383, %v381
    %v530 = vpack.c.b16 %v384, %v382
    %v531 = vpack.c.b16 %v387, %v385
    %v532 = vpack.c.b16 %v388, %v386
    %v533 = vpack.c.b16 %v391, %v389
    %v534 = vpack.c.b16 %v392, %v390
    %v535 = vpack.c.b16 %v395, %v393
    %v536 = vpack.c.b16 %v396, %v394
    %v537 = vpack.c.b16 %v399, %v397
    %v538 = vpack.c.b16 %v400, %v398
    %v539 = vpack.c.b16 %v403, %v401
    %v540 = vpack.c.b16 %v404, %v402
    %v541 = vpack.c.b16 %v407, %v405
    %v542 = vpack.c.b16 %v408, %v406
    %v543 = vpack.c.b16 %v411, %v409
    %v544 = vpack.c.b16 %v412, %v410
    %v545 = vpack.c.b16 %v415, %v413
    %v546 = vpack.c.b16 %v416, %v414
    %v547 = vpack.c.b16 %v419, %v417
    %v548 = vpack.c.b16 %v420, %v418
    %v549 = vpack.c.b16 %v423, %v421
    %v550 = vpack.c.b16 %v424, %v422
    %v551 = vpack.c.b16 %v427, %v425
    %v552 = vpack.c.b16 %v428, %v426
    %v553 = vpack.c.b16 %v431, %v429
    %v554 = vpack.c.b16 %v432, %v430
    %v555 = vpack.c.b16 %v435, %v433
    %v556 = vpack.c.b16 %v436, %v434
    %v557 = vpack.c.b16 %v439, %v437
    %v558 = vpack.c.b16 %v440, %v438
    %v559 = vpack.c.b16 %v443, %v441
    %v560 = vpack.c.b16 %v444, %v442
    %v561 = vpack.c.b16 %v447, %v445
    %v562 = vpack.c.b16 %v448, %v446
    %v563 = vpack.c.b16 %v451, %v449
    %v564 = vpack.c.b16 %v452, %v450
    %v565 = vpack.c.b16 %v455, %v453
    %v566 = vpack.c.b16 %v456, %v454
    %v567 = vpack.c.b16 %v459, %v457
    %v568 = vpack.c.b16 %v460, %v458
    %v569 = vpack.c.b16 %v463, %v461
    %v570 = vpack.c.b16 %v464, %v462
    %v571 = vpack.c.b16 %v467, %v465
    %v572 = vpack.c.b16 %v468, %v466
    %v573 = vpack.c.b16 %v471, %v469
    %v574 = vpack.c.b16 %v472, %v470
    %v575 = vpack.c.b16 %v475, %v473
    %v576 = vpack.c.b16 %v476, %v474
    %v577 = vpack.c.b16 %v479, %v477
    %v578 = vpack.c.b16 %v480, %v478
    %vm677 = vcmask 130048
    %v679 = vsel %vm677, %v180, 0
    %681 = vmatprep.subr.bf16.mxu0 %v496
    %682 = vmatpush1.bf16.msra.mxu0 %v495
    %683 = vmatprep.subr.bf16.mxu0 %v494
    %684 = vmatpush1.bf16.msra.mxu0 %v493
    %685 = vmatprep.subr.bf16.mxu0 %v492
    %686 = vmatpush1.bf16.msra.mxu0 %v491
    %687 = vmatprep.subr.bf16.mxu0 %v490
    %688 = vmatpush1.bf16.msra.mxu0 %v489
    %689 = vmatprep.subr.bf16.mxu0 %v488
    %690 = vmatpush1.bf16.msra.mxu0 %v487
    %691 = vmatprep.subr.bf16.mxu0 %v486
    %692 = vmatpush1.bf16.msra.mxu0 %v485
    %693 = vmatprep.subr.bf16.mxu0 %v484
    %694 = vmatpush1.bf16.msra.mxu0 %v483
    %695 = vmatprep.subr.bf16.mxu0 %v482
    %696 = vmatpush1.bf16.msra.mxu0 %v481
    %697 = vmatprep.subr.bf16.mxu0 %v512
    %698 = vmatpush2.bf16.msra.mxu0 %v511
    %699 = vmatprep.subr.bf16.mxu0 %v510
    %700 = vmatpush2.bf16.msra.mxu0 %v509
    %701 = vmatprep.subr.bf16.mxu0 %v508
    %702 = vmatpush2.bf16.msra.mxu0 %v507
    %703 = vmatprep.subr.bf16.mxu0 %v506
    %704 = vmatpush2.bf16.msra.mxu0 %v505
    %705 = vmatprep.subr.bf16.mxu0 %v504
    %706 = vmatpush2.bf16.msra.mxu0 %v503
    %707 = vmatprep.subr.bf16.mxu0 %v502
    %708 = vmatpush2.bf16.msra.mxu0 %v501
    %709 = vmatprep.subr.bf16.mxu0 %v500
    %710 = vmatpush2.bf16.msra.mxu0 %v499
    %711 = vmatprep.subr.bf16.mxu0 %v498
    %712 = vmatpush2.bf16.msra.mxu0 %v497
    %713 = vmatprep.mubr.bf16.mxu0 %v175
    %714 = vmatmul.mubr.bf16.gmra.mxu0 %v174
    %v715 = vpop.f32.mrf.mxu0
    %v716 = vadd.f32 0.0, %v715
    %v717 = vpop.f32.mrf.mxu0
    %v718 = vadd.f32 0.0, %v717
    %v719 = vpop.f32.mrf.mxu0
    %v720 = vadd.f32 0.0, %v719
    %v721 = vpop.f32.mrf.mxu0
    %v722 = vadd.f32 0.0, %v721
    %723 = vdwg.mxu0
    %724 = vmatprep.subr.bf16.mxu0 %v528
    %725 = vmatpush1.bf16.msra.mxu0 %v527
    %726 = vmatprep.subr.bf16.mxu0 %v526
    %727 = vmatpush1.bf16.msra.mxu0 %v525
    %728 = vmatprep.subr.bf16.mxu0 %v524
    %729 = vmatpush1.bf16.msra.mxu0 %v523
    %730 = vmatprep.subr.bf16.mxu0 %v522
    %731 = vmatpush1.bf16.msra.mxu0 %v521
    %732 = vmatprep.subr.bf16.mxu0 %v520
    %733 = vmatpush1.bf16.msra.mxu0 %v519
    %734 = vmatprep.subr.bf16.mxu0 %v518
    %735 = vmatpush1.bf16.msra.mxu0 %v517
    %736 = vmatprep.subr.bf16.mxu0 %v516
    %737 = vmatpush1.bf16.msra.mxu0 %v515
    %738 = vmatprep.subr.bf16.mxu0 %v514
    %739 = vmatpush1.bf16.msra.mxu0 %v513
    %740 = vmatprep.subr.bf16.mxu0 %v544
    %741 = vmatpush2.bf16.msra.mxu0 %v543
    %742 = vmatprep.subr.bf16.mxu0 %v542
    %743 = vmatpush2.bf16.msra.mxu0 %v541
    %744 = vmatprep.subr.bf16.mxu0 %v540
    %745 = vmatpush2.bf16.msra.mxu0 %v539
    %746 = vmatprep.subr.bf16.mxu0 %v538
    %747 = vmatpush2.bf16.msra.mxu0 %v537
    %748 = vmatprep.subr.bf16.mxu0 %v536
    %749 = vmatpush2.bf16.msra.mxu0 %v535
    %750 = vmatprep.subr.bf16.mxu0 %v534
    %751 = vmatpush2.bf16.msra.mxu0 %v533
    %752 = vmatprep.subr.bf16.mxu0 %v532
    %753 = vmatpush2.bf16.msra.mxu0 %v531
    %754 = vmatprep.subr.bf16.mxu0 %v530
    %755 = vmatpush2.bf16.msra.mxu0 %v529
    %756 = vmatprep.mubr.bf16.mxu0 %v177
    %757 = vmatmul.mubr.bf16.gmra.mxu0 %v176
    %v758 = vpop.f32.mrf.mxu0
    %v759 = vadd.f32 %v716, %v758
    %v760 = vpop.f32.mrf.mxu0
    %v761 = vadd.f32 %v718, %v760
    %v762 = vpop.f32.mrf.mxu0
    %v763 = vadd.f32 %v720, %v762
    %v764 = vpop.f32.mrf.mxu0
    %v765 = vadd.f32 %v722, %v764
    %766 = vdwg.mxu0
    %767 = vmatprep.subr.bf16.mxu0 %v560
    %768 = vmatpush1.bf16.msra.mxu0 %v559
    %769 = vmatprep.subr.bf16.mxu0 %v558
    %770 = vmatpush1.bf16.msra.mxu0 %v557
    %771 = vmatprep.subr.bf16.mxu0 %v556
    %772 = vmatpush1.bf16.msra.mxu0 %v555
    %773 = vmatprep.subr.bf16.mxu0 %v554
    %774 = vmatpush1.bf16.msra.mxu0 %v553
    %775 = vmatprep.subr.bf16.mxu0 %v552
    %776 = vmatpush1.bf16.msra.mxu0 %v551
    %777 = vmatprep.subr.bf16.mxu0 %v550
    %778 = vmatpush1.bf16.msra.mxu0 %v549
    %779 = vmatprep.subr.bf16.mxu0 %v548
    %780 = vmatpush1.bf16.msra.mxu0 %v547
    %781 = vmatprep.subr.bf16.mxu0 %v546
    %782 = vmatpush1.bf16.msra.mxu0 %v545
    %783 = vmatprep.subr.bf16.mxu0 %v576
    %784 = vmatpush2.bf16.msra.mxu0 %v575
    %785 = vmatprep.subr.bf16.mxu0 %v574
    %786 = vmatpush2.bf16.msra.mxu0 %v573
    %787 = vmatprep.subr.bf16.mxu0 %v572
    %788 = vmatpush2.bf16.msra.mxu0 %v571
    %789 = vmatprep.subr.bf16.mxu0 %v570
    %790 = vmatpush2.bf16.msra.mxu0 %v569
    %791 = vmatprep.subr.bf16.mxu0 %v568
    %792 = vmatpush2.bf16.msra.mxu0 %v567
    %793 = vmatprep.subr.bf16.mxu0 %v566
    %794 = vmatpush2.bf16.msra.mxu0 %v565
    %795 = vmatprep.subr.bf16.mxu0 %v564
    %796 = vmatpush2.bf16.msra.mxu0 %v563
    %797 = vmatprep.subr.bf16.mxu0 %v562
    %798 = vmatpush2.bf16.msra.mxu0 %v561
    %799 = vmatprep.mubr.bf16.mxu0 %v179
    %800 = vmatmul.mubr.bf16.gmra.mxu0 %v178
    %v801 = vpop.f32.mrf.mxu0
    %v802 = vadd.f32 %v759, %v801
    %v803 = vpop.f32.mrf.mxu0
    %v804 = vadd.f32 %v761, %v803
    %v805 = vpop.f32.mrf.mxu0
    %v806 = vadd.f32 %v763, %v805
    %v807 = vpop.f32.mrf.mxu0
    %v808 = vadd.f32 %v765, %v807
    %809 = vdwg.mxu0
    %810 = vmatprep.subr.bf16.mxu0 0
    %811 = vmatpush1.bf16.msra.mxu0 0
    %812 = vmatprep.subr.bf16.mxu0 0
    %813 = vmatpush1.bf16.msra.mxu0 0
    %814 = vmatprep.subr.bf16.mxu0 0
    %815 = vmatpush1.bf16.msra.mxu0 0
    %816 = vmatprep.subr.bf16.mxu0 0
    %817 = vmatpush1.bf16.msra.mxu0 0
    %818 = vmatprep.subr.bf16.mxu0 0
    %819 = vmatpush1.bf16.msra.mxu0 0
    %820 = vmatprep.subr.bf16.mxu0 0
    %821 = vmatpush1.bf16.msra.mxu0 0
    %822 = vmatprep.subr.bf16.mxu0 0
    %823 = vmatpush1.bf16.msra.mxu0 0
    %824 = vmatprep.subr.bf16.mxu0 %v578
    %825 = vmatpush1.bf16.msra.mxu0 %v577
    %826 = vmatprep.subr.bf16.mxu0 0
    %827 = vmatpush2.bf16.msra.mxu0 0
    %828 = vmatprep.subr.bf16.mxu0 0
    %829 = vmatpush2.bf16.msra.mxu0 0
    %830 = vmatprep.subr.bf16.mxu0 0
    %831 = vmatpush2.bf16.msra.mxu0 0
    %832 = vmatprep.subr.bf16.mxu0 0
    %833 = vmatpush2.bf16.msra.mxu0 0
    %834 = vmatprep.subr.bf16.mxu0 0
    %835 = vmatpush2.bf16.msra.mxu0 0
    %836 = vmatprep.subr.bf16.mxu0 0
    %837 = vmatpush2.bf16.msra.mxu0 0
    %838 = vmatprep.subr.bf16.mxu0 0
    %839 = vmatpush2.bf16.msra.mxu0 0
    %840 = vmatprep.subr.bf16.mxu0 0
    %841 = vmatpush2.bf16.msra.mxu0 0
    %842 = vmatprep.mubr.bf16.mxu0 0
    %843 = vmatmul.mubr.bf16.gmra.mxu0 %v679
    %v844 = vpop.f32.mrf.mxu0
    %v845 = vadd.f32 %v802, %v844
    %v846 = vpop.f32.mrf.mxu0
    %v847 = vadd.f32 %v804, %v846
    %v848 = vpop.f32.mrf.mxu0
    %v849 = vadd.f32 %v806, %v848
    %v850 = vpop.f32.mrf.mxu0
    %v851 = vadd.f32 %v808, %v850
    %852 = vdwg.mxu0
    %v853 = vmax.f32 %v845, 0.0
    %v854 = vmax.f32 %v847, 0.0
    %v855 = vmax.f32 %v849, 0.0
    %v856 = vmax.f32 %v851, 0.0
    %v857 = vpack.c.bf16 %v855, %v853
    %v858 = vpack.c.bf16 %v856, %v854
    %v859 = vld [vmem:[#allocation4] sm:$0xff]
    %v860 = vld [vmem:[#allocation4 + $0x8] sm:$0xff]
    %v861 = vld [vmem:[#allocation4 + $0x10] sm:$0xff]
    %v862 = vld [vmem:[#allocation4 + $0x18] sm:$0xff]
    %v863 = vld [vmem:[#allocation4 + $0x20] sm:$0xff]
    %v864 = vld [vmem:[#allocation4 + $0x28] sm:$0xff]
    %v865 = vld [vmem:[#allocation4 + $0x30] sm:$0xff]
    %v866 = vld [vmem:[#allocation4 + $0x38] sm:$0xff]
    %v867 = vld [vmem:[#allocation4 + $0x40] sm:$0xff]
    %v868 = vld [vmem:[#allocation4 + $0x48] sm:$0xff]
    %v869 = vld [vmem:[#allocation4 + $0x50] sm:$0xff]
    %v870 = vld [vmem:[#allocation4 + $0x58] sm:$0xff]
    %v871 = vld [vmem:[#allocation4 + $0x60] sm:$0xff]
    %v872 = vld [vmem:[#allocation4 + $0x68] sm:$0xff]
    %v873 = vld [vmem:[#allocation4 + $0x70] sm:$0xff]
    %v874 = vld [vmem:[#allocation4 + $0x78] sm:$0xff]
    %v875 = vld [vmem:[#allocation4 + $0x80] sm:$0xff]
    %v876 = vld [vmem:[#allocation4 + $0x88] sm:$0xff]
    %v877 = vld [vmem:[#allocation4 + $0x90] sm:$0xff]
    %v878 = vld [vmem:[#allocation4 + $0x98] sm:$0xff]
    %v879 = vld [vmem:[#allocation4 + $0xa0] sm:$0xff]
    %v880 = vld [vmem:[#allocation4 + $0xa8] sm:$0xff]
    %v881 = vld [vmem:[#allocation4 + $0xb0] sm:$0xff]
    %v882 = vld [vmem:[#allocation4 + $0xb8] sm:$0xff]
    %v883 = vld [vmem:[#allocation4 + $0xc0] sm:$0xff]
    %v884 = vld [vmem:[#allocation4 + $0xc8] sm:$0xff]
    %v885 = vld [vmem:[#allocation4 + $0xd0] sm:$0xff]
    %v886 = vld [vmem:[#allocation4 + $0xd8] sm:$0xff]
    %v887 = vld [vmem:[#allocation4 + $0xe0] sm:$0xff]
    %v888 = vld [vmem:[#allocation4 + $0xe8] sm:$0xff]
    %v889 = vld [vmem:[#allocation4 + $0xf0] sm:$0xff]
    %v890 = vld [vmem:[#allocation4 + $0xf8] sm:$0xff]
    %v923 = vunpack.c.l.b16 %v859
    %v924 = vunpack.c.h.b16 %v859
    %v925 = vunpack.c.l.b16 %v860
    %v926 = vunpack.c.h.b16 %v860
    %v927 = vunpack.c.l.b16 %v861
    %v928 = vunpack.c.h.b16 %v861
    %v929 = vunpack.c.l.b16 %v862
    %v930 = vunpack.c.h.b16 %v862
    %v931 = vunpack.c.l.b16 %v863
    %v932 = vunpack.c.h.b16 %v863
    %v933 = vunpack.c.l.b16 %v864
    %v934 = vunpack.c.h.b16 %v864
    %v935 = vunpack.c.l.b16 %v865
    %v936 = vunpack.c.h.b16 %v865
    %v937 = vunpack.c.l.b16 %v866
    %v938 = vunpack.c.h.b16 %v866
    %v939 = vunpack.c.l.b16 %v867
    %v940 = vunpack.c.h.b16 %v867
    %v941 = vunpack.c.l.b16 %v868
    %v942 = vunpack.c.h.b16 %v868
    %v943 = vunpack.c.l.b16 %v869
    %v944 = vunpack.c.h.b16 %v869
    %v945 = vunpack.c.l.b16 %v870
    %v946 = vunpack.c.h.b16 %v870
    %v947 = vunpack.c.l.b16 %v871
    %v948 = vunpack.c.h.b16 %v871
    %v949 = vunpack.c.l.b16 %v872
    %v950 = vunpack.c.h.b16 %v872
    %v951 = vunpack.c.l.b16 %v873
    %v952 = vunpack.c.h.b16 %v873
    %v953 = vunpack.c.l.b16 %v874
    %v954 = vunpack.c.h.b16 %v874
    %v955 = vunpack.c.l.b16 %v875
    %v956 = vunpack.c.h.b16 %v875
    %v957 = vunpack.c.l.b16 %v876
    %v958 = vunpack.c.h.b16 %v876
    %v959 = vunpack.c.l.b16 %v877
    %v960 = vunpack.c.h.b16 %v877
    %v961 = vunpack.c.l.b16 %v878
    %v962 = vunpack.c.h.b16 %v878
    %v963 = vunpack.c.l.b16 %v879
    %v964 = vunpack.c.h.b16 %v879
    %v965 = vunpack.c.l.b16 %v880
    %v966 = vunpack.c.h.b16 %v880
    %v967 = vunpack.c.l.b16 %v881
    %v968 = vunpack.c.h.b16 %v881
    %v969 = vunpack.c.l.b16 %v882
    %v970 = vunpack.c.h.b16 %v882
    %v971 = vunpack.c.l.b16 %v883
    %v972 = vunpack.c.h.b16 %v883
    %v973 = vunpack.c.l.b16 %v884
    %v974 = vunpack.c.h.b16 %v884
    %v975 = vunpack.c.l.b16 %v885
    %v976 = vunpack.c.h.b16 %v885
    %v977 = vunpack.c.l.b16 %v886
    %v978 = vunpack.c.h.b16 %v886
    %v979 = vunpack.c.l.b16 %v887
    %v980 = vunpack.c.h.b16 %v887
    %v981 = vunpack.c.l.b16 %v888
    %v982 = vunpack.c.h.b16 %v888
    %v983 = vunpack.c.l.b16 %v889
    %v984 = vunpack.c.h.b16 %v889
    %v985 = vunpack.c.l.b16 %v890
    %v986 = vunpack.c.h.b16 %v890
    %v987 = vpack.c.b16 %v925, %v923
    %v988 = vpack.c.b16 %v926, %v924
    %v989 = vpack.c.b16 %v929, %v927
    %v990 = vpack.c.b16 %v930, %v928
    %v991 = vpack.c.b16 %v933, %v931
    %v992 = vpack.c.b16 %v934, %v932
    %v993 = vpack.c.b16 %v937, %v935
    %v994 = vpack.c.b16 %v938, %v936
    %v995 = vpack.c.b16 %v941, %v939
    %v996 = vpack.c.b16 %v942, %v940
    %v997 = vpack.c.b16 %v945, %v943
    %v998 = vpack.c.b16 %v946, %v944
    %v999 = vpack.c.b16 %v949, %v947
    %v1000 = vpack.c.b16 %v950, %v948
    %v1001 = vpack.c.b16 %v953, %v951
    %v1002 = vpack.c.b16 %v954, %v952
    %v1003 = vpack.c.b16 %v957, %v955
    %v1004 = vpack.c.b16 %v958, %v956
    %v1005 = vpack.c.b16 %v961, %v959
    %v1006 = vpack.c.b16 %v962, %v960
    %v1007 = vpack.c.b16 %v965, %v963
    %v1008 = vpack.c.b16 %v966, %v964
    %v1009 = vpack.c.b16 %v969, %v967
    %v1010 = vpack.c.b16 %v970, %v968
    %v1011 = vpack.c.b16 %v973, %v971
    %v1012 = vpack.c.b16 %v974, %v972
    %v1013 = vpack.c.b16 %v977, %v975
    %v1014 = vpack.c.b16 %v978, %v976
    %v1015 = vpack.c.b16 %v981, %v979
    %v1016 = vpack.c.b16 %v982, %v980
    %v1017 = vpack.c.b16 %v985, %v983
    %v1018 = vpack.c.b16 %v986, %v984
    %1051 = vmatprep.subr.bf16.mxu0 %v1002
    %1052 = vmatpush1.bf16.msra.mxu0 %v1001
    %1053 = vmatprep.subr.bf16.mxu0 %v1000
    %1054 = vmatpush1.bf16.msra.mxu0 %v999
    %1055 = vmatprep.subr.bf16.mxu0 %v998
    %1056 = vmatpush1.bf16.msra.mxu0 %v997
    %1057 = vmatprep.subr.bf16.mxu0 %v996
    %1058 = vmatpush1.bf16.msra.mxu0 %v995
    %1059 = vmatprep.subr.bf16.mxu0 %v994
    %1060 = vmatpush1.bf16.msra.mxu0 %v993
    %1061 = vmatprep.subr.bf16.mxu0 %v992
    %1062 = vmatpush1.bf16.msra.mxu0 %v991
    %1063 = vmatprep.subr.bf16.mxu0 %v990
    %1064 = vmatpush1.bf16.msra.mxu0 %v989
    %1065 = vmatprep.subr.bf16.mxu0 %v988
    %1066 = vmatpush1.bf16.msra.mxu0 %v987
    %1067 = vmatprep.subr.bf16.mxu0 %v1018
    %1068 = vmatpush2.bf16.msra.mxu0 %v1017
    %1069 = vmatprep.subr.bf16.mxu0 %v1016
    %1070 = vmatpush2.bf16.msra.mxu0 %v1015
    %1071 = vmatprep.subr.bf16.mxu0 %v1014
    %1072 = vmatpush2.bf16.msra.mxu0 %v1013
    %1073 = vmatprep.subr.bf16.mxu0 %v1012
    %1074 = vmatpush2.bf16.msra.mxu0 %v1011
    %1075 = vmatprep.subr.bf16.mxu0 %v1010
    %1076 = vmatpush2.bf16.msra.mxu0 %v1009
    %1077 = vmatprep.subr.bf16.mxu0 %v1008
    %1078 = vmatpush2.bf16.msra.mxu0 %v1007
    %1079 = vmatprep.subr.bf16.mxu0 %v1006
    %1080 = vmatpush2.bf16.msra.mxu0 %v1005
    %1081 = vmatprep.subr.bf16.mxu0 %v1004
    %1082 = vmatpush2.bf16.msra.mxu0 %v1003
    %1083 = vmatprep.mubr.bf16.mxu0 %v858
    %1084 = vmatmul.mubr.bf16.gmra.mxu0 %v857
    %v1085 = vpop.f32.mrf.mxu0
    %v1086 = vadd.f32 0.0, %v1085
    %v1087 = vpop.f32.mrf.mxu0
    %v1088 = vadd.f32 0.0, %v1087
    %v1089 = vpop.f32.mrf.mxu0
    %v1090 = vadd.f32 0.0, %v1089
    %v1091 = vpop.f32.mrf.mxu0
    %v1092 = vadd.f32 0.0, %v1091
    %1093 = vdwg.mxu0
    %v1094 = vmax.f32 %v1086, 0.0
    %v1095 = vmax.f32 %v1088, 0.0
    %v1096 = vmax.f32 %v1090, 0.0
    %v1097 = vmax.f32 %v1092, 0.0
    %v1098 = vpack.c.bf16 %v1096, %v1094
    %v1099 = vpack.c.bf16 %v1097, %v1095
    %v1100 = vld [vmem:[%s3] sm:$0xf]
    %v1101 = vld [vmem:[%s3 + $0x4] sm:$0xf]
    %v1102 = vld [vmem:[%s3 + $0x8] sm:$0xf]
    %v1103 = vld [vmem:[%s3 + $0xc] sm:$0xf]
    %v1104 = vld [vmem:[%s3 + $0x10] sm:$0xf]
    %v1105 = vld [vmem:[%s3 + $0x14] sm:$0xf]
    %v1106 = vld [vmem:[%s3 + $0x18] sm:$0xf]
    %v1107 = vld [vmem:[%s3 + $0x1c] sm:$0xf]
    %v1108 = vld [vmem:[%s3 + $0x20] sm:$0xf]
    %v1109 = vld [vmem:[%s3 + $0x24] sm:$0xf]
    %v1110 = vld [vmem:[%s3 + $0x28] sm:$0xf]
    %v1111 = vld [vmem:[%s3 + $0x2c] sm:$0xf]
    %v1112 = vld [vmem:[%s3 + $0x30] sm:$0xf]
    %v1113 = vld [vmem:[%s3 + $0x34] sm:$0xf]
    %v1114 = vld [vmem:[%s3 + $0x38] sm:$0xf]
    %v1115 = vld [vmem:[%s3 + $0x3c] sm:$0xf]
    %v1116 = vld [vmem:[%s3 + $0x40] sm:$0xf]
    %v1117 = vld [vmem:[%s3 + $0x44] sm:$0xf]
    %v1118 = vld [vmem:[%s3 + $0x48] sm:$0xf]
    %v1119 = vld [vmem:[%s3 + $0x4c] sm:$0xf]
    %v1120 = vld [vmem:[%s3 + $0x50] sm:$0xf]
    %v1121 = vld [vmem:[%s3 + $0x54] sm:$0xf]
    %v1122 = vld [vmem:[%s3 + $0x58] sm:$0xf]
    %v1123 = vld [vmem:[%s3 + $0x5c] sm:$0xf]
    %v1124 = vld [vmem:[%s3 + $0x60] sm:$0xf]
    %v1125 = vld [vmem:[%s3 + $0x64] sm:$0xf]
    %v1126 = vld [vmem:[%s3 + $0x68] sm:$0xf]
    %v1127 = vld [vmem:[%s3 + $0x6c] sm:$0xf]
    %v1128 = vld [vmem:[%s3 + $0x70] sm:$0xf]
    %v1129 = vld [vmem:[%s3 + $0x74] sm:$0xf]
    %v1130 = vld [vmem:[%s3 + $0x78] sm:$0xf]
    %v1131 = vld [vmem:[%s3 + $0x7c] sm:$0xf]
    %v1164 = vunpack.c.l.b16 %v1100
    %v1165 = vunpack.c.l.b16 %v1101
    %v1166 = vunpack.c.l.b16 %v1102
    %v1167 = vunpack.c.l.b16 %v1103
    %v1168 = vunpack.c.l.b16 %v1104
    %v1169 = vunpack.c.l.b16 %v1105
    %v1170 = vunpack.c.l.b16 %v1106
    %v1171 = vunpack.c.l.b16 %v1107
    %v1172 = vunpack.c.l.b16 %v1108
    %v1173 = vunpack.c.l.b16 %v1109
    %v1174 = vunpack.c.l.b16 %v1110
    %v1175 = vunpack.c.l.b16 %v1111
    %v1176 = vunpack.c.l.b16 %v1112
    %v1177 = vunpack.c.l.b16 %v1113
    %v1178 = vunpack.c.l.b16 %v1114
    %v1179 = vunpack.c.l.b16 %v1115
    %v1180 = vunpack.c.l.b16 %v1116
    %v1181 = vunpack.c.l.b16 %v1117
    %v1182 = vunpack.c.l.b16 %v1118
    %v1183 = vunpack.c.l.b16 %v1119
    %v1184 = vunpack.c.l.b16 %v1120
    %v1185 = vunpack.c.l.b16 %v1121
    %v1186 = vunpack.c.l.b16 %v1122
    %v1187 = vunpack.c.l.b16 %v1123
    %v1188 = vunpack.c.l.b16 %v1124
    %v1189 = vunpack.c.l.b16 %v1125
    %v1190 = vunpack.c.l.b16 %v1126
    %v1191 = vunpack.c.l.b16 %v1127
    %v1192 = vunpack.c.l.b16 %v1128
    %v1193 = vunpack.c.l.b16 %v1129
    %v1194 = vunpack.c.l.b16 %v1130
    %v1195 = vunpack.c.l.b16 %v1131
    %v1196 = vpack.c.b16 %v1165, %v1164
    %v1197 = vpack.c.b16 %v1167, %v1166
    %v1198 = vpack.c.b16 %v1169, %v1168
    %v1199 = vpack.c.b16 %v1171, %v1170
    %v1200 = vpack.c.b16 %v1173, %v1172
    %v1201 = vpack.c.b16 %v1175, %v1174
    %v1202 = vpack.c.b16 %v1177, %v1176
    %v1203 = vpack.c.b16 %v1179, %v1178
    %v1204 = vpack.c.b16 %v1181, %v1180
    %v1205 = vpack.c.b16 %v1183, %v1182
    %v1206 = vpack.c.b16 %v1185, %v1184
    %v1207 = vpack.c.b16 %v1187, %v1186
    %v1208 = vpack.c.b16 %v1189, %v1188
    %v1209 = vpack.c.b16 %v1191, %v1190
    %v1210 = vpack.c.b16 %v1193, %v1192
    %v1211 = vpack.c.b16 %v1195, %v1194
    %1228 = vmatprep.subr.bf16.mxu0 0
    %1229 = vmatpush1.bf16.msra.mxu0 %v1203
    %1230 = vmatprep.subr.bf16.mxu0 0
    %1231 = vmatpush1.bf16.msra.mxu0 %v1202
    %1232 = vmatprep.subr.bf16.mxu0 0
    %1233 = vmatpush1.bf16.msra.mxu0 %v1201
    %1234 = vmatprep.subr.bf16.mxu0 0
    %1235 = vmatpush1.bf16.msra.mxu0 %v1200
    %1236 = vmatprep.subr.bf16.mxu0 0
    %1237 = vmatpush1.bf16.msra.mxu0 %v1199
    %1238 = vmatprep.subr.bf16.mxu0 0
    %1239 = vmatpush1.bf16.msra.mxu0 %v1198
    %1240 = vmatprep.subr.bf16.mxu0 0
    %1241 = vmatpush1.bf16.msra.mxu0 %v1197
    %1242 = vmatprep.subr.bf16.mxu0 0
    %1243 = vmatpush1.bf16.msra.mxu0 %v1196
    %1244 = vmatprep.subr.bf16.mxu0 0
    %1245 = vmatpush2.bf16.msra.mxu0 %v1211
    %1246 = vmatprep.subr.bf16.mxu0 0
    %1247 = vmatpush2.bf16.msra.mxu0 %v1210
    %1248 = vmatprep.subr.bf16.mxu0 0
    %1249 = vmatpush2.bf16.msra.mxu0 %v1209
    %1250 = vmatprep.subr.bf16.mxu0 0
    %1251 = vmatpush2.bf16.msra.mxu0 %v1208
    %1252 = vmatprep.subr.bf16.mxu0 0
    %1253 = vmatpush2.bf16.msra.mxu0 %v1207
    %1254 = vmatprep.subr.bf16.mxu0 0
    %1255 = vmatpush2.bf16.msra.mxu0 %v1206
    %1256 = vmatprep.subr.bf16.mxu0 0
    %1257 = vmatpush2.bf16.msra.mxu0 %v1205
    %1258 = vmatprep.subr.bf16.mxu0 0
    %1259 = vmatpush2.bf16.msra.mxu0 %v1204
    %1260 = vmatprep.mubr.bf16.mxu0 %v1099
    %1261 = vmatmul.mubr.bf16.gmra.mxu0 %v1098
    %v1262 = vpop.f32.mrf.mxu0
    %v1263 = vadd.f32 0.0, %v1262
    %v1264 = vpop.f32.mrf.mxu0
    %v1265 = vpop.f32.mrf.mxu0
    %v1266 = vadd.f32 0.0, %v1265
    %v1267 = vpop.f32.mrf.mxu0
    %1268 = vdwg.mxu0
    %1269 = vst [vmem:[%s4] sm:$0xff] %v1263
    %1270 = vst [vmem:[%s4 + $0x8] sm:$0xff] %v1266
    // Predicated region
    $region26: #{fc_forward.1} parent=1 // pred_check
      _
    $region27: #{fc_forward.1} parent=1 // pred_check_branch
      %1272 = sbr.rel (0) target = $region29
    $region28: #{fc_forward.1} parent=1 // pred_region
      _
    $region29: #{fc_forward.1} parent=1 // pred_fallthru
      _
    // Predicated region
    $region30: #{fc_forward.1} parent=1 // pred_check
      _
    $region31: #{fc_forward.1} parent=1 // pred_check_branch
      %1274 = sbr.rel (0) target = $region33
    $region32: #{fc_forward.1} parent=1 // pred_region
      _
    $region33: #{fc_forward.1} parent=1 // pred_fallthru
      _
    %1275 = vsyncpa [#allocation3], 1
    %1276 = vsyncpa [#allocation5], 1

</llo_original>
